<compile_context>
chip_gen: v6e
topology: v6e:2x2x1
jax: 0.10.0
libtpu: 0.0.40
codegen_flags: <defaults>
</compile_context>

<pallas_src>
import math
from functools import partial

import jax
import jax.numpy as jnp
from jax import lax
from jax.experimental import pallas as pl
from jax.experimental.pallas import tpu as pltpu


# ----------------------------------------------------------------------------
# Fused MHA kernel. One grid step = one (batch, head) pair.
#   in refs : q (Lq,in), k (Lk,in), v (Lk,in),
#             wq/wk/wv (in,d)  [per-head slice],  wo (d,out) [per-head slice]
#   out refs: hidden (Lq,out) [accumulated over h], attention (Lq,Lk) [optional]
#   scratch : acc (Lq,out) f32
# ----------------------------------------------------------------------------
def _mha_head_kernel(q_ref, k_ref, v_ref, wq_ref, wk_ref, wv_ref, wo_ref,
                     hid_ref, *rest, key_value_size, with_attention):
    if with_attention:
        attn_ref, acc_ref = rest
    else:
        (acc_ref,) = rest

    h = pl.program_id(1)
    d = key_value_size
    scale = 1.0 / math.sqrt(d)

    @pl.when(h == 0)
    def _():
        acc_ref[...] = jnp.zeros_like(acc_ref)

    # --- per-head Q/K/V projections (MXU, bf16 operands, f32 accumulation) --
    q = jnp.dot(q_ref[...], wq_ref[...], preferred_element_type=jnp.float32)  # (Lq, d)
    k = jnp.dot(k_ref[...], wk_ref[...], preferred_element_type=jnp.float32)  # (Lk, d)
    v = jnp.dot(v_ref[...], wv_ref[...], preferred_element_type=jnp.float32)  # (Lk, d)

    # Fold the 1/sqrt(d) scale into q (Lq*d multiplies instead of Lq*Lk).
    q = (q * scale).astype(jnp.bfloat16)
    k = k.astype(jnp.bfloat16)
    v = v.astype(jnp.bfloat16)

    # scores = q @ k^T, contracting last axes (no explicit transpose).
    scores = lax.dot_general(
        q, k, (((1,), (1,)), ((), ())),
        preferred_element_type=jnp.float32)                 # (Lq, Lk) f32

    # numerically-stable softmax; math stays f32 (v5e VPU/EUP have no bf16),
    # reciprocal runs on the EUP slot.
    m = jnp.max(scores, axis=-1, keepdims=True)
    e = jnp.exp(scores - m)
    inv = pl.reciprocal(jnp.sum(e, axis=-1, keepdims=True), approx=True)
    attn = e * inv

    if with_attention:
        attn_ref[...] = attn.astype(attn_ref.dtype)

    # TODO(synk): dropout on `attn` skipped (eval-mode identity).
    head_out = jnp.dot(attn.astype(jnp.bfloat16), v,
                       preferred_element_type=jnp.float32)  # (Lq, d) f32

    # Fused output projection, accumulated over heads:
    #   hidden = sum_h (attn_h @ v_h) @ Wo[h*d:(h+1)*d, :]
    acc_ref[...] += jnp.dot(head_out.astype(jnp.bfloat16), wo_ref[...],
                            preferred_element_type=jnp.float32)

    @pl.when(h == pl.num_programs(1) - 1)
    def _():
        hid_ref[...] = acc_ref[...].astype(hid_ref.dtype)


# ----------------------------------------------------------------------------
# Module-equivalent wrapper
# ----------------------------------------------------------------------------
def multi_head_attention(query, key, value, params, heads, key_value_size,
                         *, out_dtype=jnp.bfloat16, attn_dtype=jnp.bfloat16,
                         return_attention=True):
    """Returns {'hidden': (B, Lq, output_size), 'attention': (B, H, Lq, Lk) or None}."""
    B, Lq, in_sz = query.shape
    Lk = key.shape[1]
    d = key_value_size
    out_sz = params["wo"].shape[1]

    cd = jnp.bfloat16  # MXU feed dtype (accumulation stays f32 in-kernel)
    q_in = query.astype(cd)
    k_in = key.astype(cd)
    v_in = value.astype(cd)
    # Pre-split weights per head in HBM (one-time layout change) so each grid
    # step's weight block is a full-extent (in, d) / (d, out) slab.
    wq = params["wq"].astype(cd).reshape(in_sz, heads, d).transpose(1, 0, 2)  # (H, in, d)
    wk = params["wk"].astype(cd).reshape(in_sz, heads, d).transpose(1, 0, 2)  # (H, in, d)
    wv = params["wv"].astype(cd).reshape(in_sz, heads, d).transpose(1, 0, 2)  # (H, in, d)
    wo = params["wo"].astype(cd).reshape(heads, d, out_sz)                    # (H, d, out)

    in_specs = [
        pl.BlockSpec((None, Lq, in_sz), lambda b, h: (b, 0, 0)),   # query (reused across h)
        pl.BlockSpec((None, Lk, in_sz), lambda b, h: (b, 0, 0)),   # key
        pl.BlockSpec((None, Lk, in_sz), lambda b, h: (b, 0, 0)),   # value
        pl.BlockSpec((None, in_sz, d), lambda b, h: (h, 0, 0)),    # wq head slice
        pl.BlockSpec((None, in_sz, d), lambda b, h: (h, 0, 0)),    # wk head slice
        pl.BlockSpec((None, in_sz, d), lambda b, h: (h, 0, 0)),    # wv head slice
        pl.BlockSpec((None, d, out_sz), lambda b, h: (h, 0, 0)),   # wo head slice
    ]

    hid_shape = jax.ShapeDtypeStruct((B, Lq, out_sz), out_dtype)
    hid_spec = pl.BlockSpec((None, Lq, out_sz), lambda b, h: (b, 0, 0))  # resident over h

    if return_attention:
        out_shape = (hid_shape,
                     jax.ShapeDtypeStruct((B, heads, Lq, Lk), attn_dtype))
        out_specs = (hid_spec,
                     pl.BlockSpec((None, None, Lq, Lk), lambda b, h: (b, h, 0, 0)))
    else:
        out_shape = hid_shape
        out_specs = hid_spec

    # VMEM budget derived from the actual per-step blocks (double-buffered
    # inputs/outputs + f32 accumulator), clamped per-generation-safe range.
    bpe = jnp.dtype(cd).itemsize
    in_bytes = (Lq * in_sz + 2 * Lk * in_sz + 3 * in_sz * d + d * out_sz) * bpe
    out_bytes = Lq * out_sz * jnp.dtype(out_dtype).itemsize
    if return_attention:
        out_bytes += Lq * Lk * jnp.dtype(attn_dtype).itemsize
    scratch_bytes = Lq * out_sz * 4
    vmem_limit = int(min(max(4 * (in_bytes + out_bytes) + 2 * scratch_bytes,
                             32 << 20), 100 << 20))

    kernel = partial(_mha_head_kernel, key_value_size=d,
                     with_attention=return_attention)

    result = pl.pallas_call(
        kernel,
        out_shape=out_shape,
        grid=(B, heads),
        in_specs=in_specs,
        out_specs=out_specs,
        scratch_shapes=[pltpu.VMEM((Lq, out_sz), jnp.float32)],
        compiler_params=pltpu.CompilerParams(
            dimension_semantics=("parallel", "arbitrary"),
            vmem_limit_bytes=vmem_limit),
    )(q_in, k_in, v_in, wq, wk, wv, wo)

    if return_attention:
        hidden, attn = result
        return {"hidden": hidden, "attention": attn}
    return {"hidden": result, "attention": None}


# ----------------------------------------------------------------------------
# Parameter init mirroring torch.nn.Linear (weights stored as (in, out), bias=False)
# ----------------------------------------------------------------------------
def init_params(key, input_size, output_size, key_value_size, heads):
    inner = heads * key_value_size
    k1, k2, k3, k4 = jax.random.split(key, 4)

    def uinit(k, fan_in, shape):
        bound = 1.0 / math.sqrt(fan_in)
        return jax.random.uniform(k, shape, jnp.float32, -bound, bound)

    return {
        "wq": uinit(k1, input_size, (input_size, inner)),
        "wk": uinit(k2, input_size, (input_size, inner)),
        "wv": uinit(k3, input_size, (input_size, inner)),
        "wo": uinit(k4, inner, (inner, output_size)),
    }


# ----------------------------------------------------------------------------
# Pure-JAX f32 reference (for a sanity check)
# ----------------------------------------------------------------------------
def reference(query, key, value, params, heads, key_value_size):
    B, Lq, _ = query.shape
    Lk = key.shape[1]
    inner = heads * key_value_size
    q = (query @ params["wq"]).reshape(B, Lq, heads, key_value_size).transpose(0, 2, 1, 3)
    k = (key @ params["wk"]).reshape(B, Lk, heads, key_value_size).transpose(0, 2, 1, 3)
    v = (value @ params["wv"]).reshape(B, Lk, heads, key_value_size).transpose(0, 2, 1, 3)
    scores = jnp.einsum("bnqd,bnkd->bnqk", q, k) / jnp.sqrt(jnp.float32(key_value_size))
    attn = jax.nn.softmax(scores, axis=-1)
    hid = attn @ v
    joined = hid.transpose(0, 2, 1, 3).reshape(B, Lq, inner)
    hidden = joined @ params["wo"]
    return {"hidden": hidden, "attention": attn}


if __name__ == "__main__":
    # small, module-consistent shapes
    batch = 2
    seq = 8
    input_size = 32
    output_size = 32
    key_value_size = 8
    heads = 4

    root = jax.random.PRNGKey(0)
    kp, kq, kk, kv = jax.random.split(root, 4)
    params = init_params(kp, input_size, output_size, key_value_size, heads)

    query = jax.random.normal(kq, (batch, seq, input_size), jnp.float32)
    key = jax.random.normal(kk, (batch, seq, input_size), jnp.float32)
    value = jax.random.normal(kv, (batch, seq, input_size), jnp.float32)

    ref = reference(query, key, value, params, heads, key_value_size)

    # Full forward (matches the PyTorch module: returns hidden + attention).
    out = multi_head_attention(query, key, value, params, heads, key_value_size,
                               return_attention=True)
    jax.block_until_ready(out)
    assert out["hidden"].shape == (batch, seq, output_size)
    assert out["attention"].shape == (batch, heads, seq, seq)
    # bf16 MXU feeds / bf16 outputs with f32 accumulation -> modest tolerance.
    assert jnp.allclose(out["attention"].astype(jnp.float32), ref["attention"],
                        atol=5e-2, rtol=5e-2)
    assert jnp.allclose(out["hidden"].astype(jnp.float32), ref["hidden"],
                        atol=5e-2, rtol=5e-2)

    # Fast path: skip the (B,H,Lq,Lk) attention-probability writeback entirely.
    out2 = multi_head_attention(query, key, value, params, heads, key_value_size,
                                return_attention=False)
    jax.block_until_ready(out2["hidden"])
    assert out2["attention"] is None
    assert jnp.allclose(out2["hidden"].astype(jnp.float32), ref["hidden"],
                        atol=5e-2, rtol=5e-2)

    print("KERNEL_OK")
</pallas_src>

<mosaic_0001>
module attributes {stable_mosaic.version = 11 : i64} {
  func.func @_mha_head_kernel(%arg0: i32, %arg1: i32, %arg2: memref<1x8x32xbf16, #tpu.memory_space<vmem>>, %arg3: memref<1x8x32xbf16, #tpu.memory_space<vmem>>, %arg4: memref<1x8x32xbf16, #tpu.memory_space<vmem>>, %arg5: memref<1x32x8xbf16, #tpu.memory_space<vmem>>, %arg6: memref<1x32x8xbf16, #tpu.memory_space<vmem>>, %arg7: memref<1x32x8xbf16, #tpu.memory_space<vmem>>, %arg8: memref<1x8x32xbf16, #tpu.memory_space<vmem>>, %arg9: memref<1x8x32xbf16, #tpu.memory_space<vmem>>, %arg10: memref<1x1x8x8xbf16, #tpu.memory_space<vmem>>, %arg11: memref<8x32xf32, #tpu.memory_space<vmem>>) attributes {dimension_semantics = [#tpu.dimension_semantics<parallel>, #tpu.dimension_semantics<arbitrary>], iteration_bounds = array<i64: 2, 4>, scalar_prefetch = 0 : i64, scratch_operands = 1 : i64, tpu.core_type = #tpu.core_type<tc>, window_params = [{transform_indices = @transform_0, window_bounds = array<i64: 1, 8, 32>}, {transform_indices = @transform_1, window_bounds = array<i64: 1, 8, 32>}, {transform_indices = @transform_2, window_bounds = array<i64: 1, 8, 32>}, {transform_indices = @transform_3, window_bounds = array<i64: 1, 32, 8>}, {transform_indices = @transform_4, window_bounds = array<i64: 1, 32, 8>}, {transform_indices = @transform_5, window_bounds = array<i64: 1, 32, 8>}, {transform_indices = @transform_6, window_bounds = array<i64: 1, 8, 32>}, {transform_indices = @transform_7, window_bounds = array<i64: 1, 8, 32>}, {transform_indices = @transform_8, window_bounds = array<i64: 1, 1, 8, 8>}]} {
    %c0_i32 = arith.constant 0 : i32
    %0 = arith.cmpi eq, %arg1, %c0_i32 : i32
    %1 = arith.extui %0 : i1 to i32
    %c0_i32_0 = arith.constant 0 : i32
    %2 = arith.cmpi ne, %1, %c0_i32_0 : i32
    scf.if %2 {
      %cst_38 = arith.constant 0.000000e+00 : f32
      %50 = vector.broadcast %cst_38 : f32 to vector<8x32xf32>
      %c0_39 = arith.constant 0 : index
      %c0_40 = arith.constant 0 : index
      %51 = vector.load %arg11[%c0_39, %c0_40] : memref<8x32xf32, #tpu.memory_space<vmem>>, vector<8x32xf32>
      tpu.vector_store %arg11[%c0_39, %c0_40], %50 {strides = array<i32>} : memref<8x32xf32, #tpu.memory_space<vmem>>, vector<8x32xf32>,
    } else {
    }
    %c0 = arith.constant 0 : index
    %c0_1 = arith.constant 0 : index
    %c0_2 = arith.constant 0 : index
    %3 = vector.load %arg2[%c0, %c0_1, %c0_2] : memref<1x8x32xbf16, #tpu.memory_space<vmem>>, vector<1x8x32xbf16>
    %4 = vector.shape_cast %3 : vector<1x8x32xbf16> to vector<8x32xbf16>
    %c0_3 = arith.constant 0 : index
    %c0_4 = arith.constant 0 : index
    %c0_5 = arith.constant 0 : index
    %5 = vector.load %arg5[%c0_3, %c0_4, %c0_5] : memref<1x32x8xbf16, #tpu.memory_space<vmem>>, vector<1x32x8xbf16>
    %6 = vector.shape_cast %5 : vector<1x32x8xbf16> to vector<32x8xbf16>
    %cst = arith.constant dense<0.000000e+00> : vector<8x8xf32>
    %7 = tpu.matmul %4, %6, %cst {dimension_numbers = #tpu.dot_dimension_numbers<[1], [0], [0], [1], [0, 0, 1, 1], [], []>} : vector<8x32xbf16>, vector<32x8xbf16>, vector<8x8xf32> -> vector<8x8xf32>
    %c0_6 = arith.constant 0 : index
    %c0_7 = arith.constant 0 : index
    %c0_8 = arith.constant 0 : index
    %8 = vector.load %arg3[%c0_6, %c0_7, %c0_8] : memref<1x8x32xbf16, #tpu.memory_space<vmem>>, vector<1x8x32xbf16>
    %9 = vector.shape_cast %8 : vector<1x8x32xbf16> to vector<8x32xbf16>
    %c0_9 = arith.constant 0 : index
    %c0_10 = arith.constant 0 : index
    %c0_11 = arith.constant 0 : index
    %10 = vector.load %arg6[%c0_9, %c0_10, %c0_11] : memref<1x32x8xbf16, #tpu.memory_space<vmem>>, vector<1x32x8xbf16>
    %11 = vector.shape_cast %10 : vector<1x32x8xbf16> to vector<32x8xbf16>
    %cst_12 = arith.constant dense<0.000000e+00> : vector<8x8xf32>
    %12 = tpu.matmul %9, %11, %cst_12 {dimension_numbers = #tpu.dot_dimension_numbers<[1], [0], [0], [1], [0, 0, 1, 1], [], []>} : vector<8x32xbf16>, vector<32x8xbf16>, vector<8x8xf32> -> vector<8x8xf32>
    %c0_13 = arith.constant 0 : index
    %c0_14 = arith.constant 0 : index
    %c0_15 = arith.constant 0 : index
    %13 = vector.load %arg4[%c0_13, %c0_14, %c0_15] : memref<1x8x32xbf16, #tpu.memory_space<vmem>>, vector<1x8x32xbf16>
    %14 = vector.shape_cast %13 : vector<1x8x32xbf16> to vector<8x32xbf16>
    %c0_16 = arith.constant 0 : index
    %c0_17 = arith.constant 0 : index
    %c0_18 = arith.constant 0 : index
    %15 = vector.load %arg7[%c0_16, %c0_17, %c0_18] : memref<1x32x8xbf16, #tpu.memory_space<vmem>>, vector<1x32x8xbf16>
    %16 = vector.shape_cast %15 : vector<1x32x8xbf16> to vector<32x8xbf16>
    %cst_19 = arith.constant dense<0.000000e+00> : vector<8x8xf32>
    %17 = tpu.matmul %14, %16, %cst_19 {dimension_numbers = #tpu.dot_dimension_numbers<[1], [0], [0], [1], [0, 0, 1, 1], [], []>} : vector<8x32xbf16>, vector<32x8xbf16>, vector<8x8xf32> -> vector<8x8xf32>
    %cst_20 = arith.constant 0.353553385 : f32
    %18 = vector.broadcast %cst_20 : f32 to vector<8x8xf32>
    %19 = arith.mulf %7, %18 : vector<8x8xf32>
    %20 = arith.truncf %19 : vector<8x8xf32> to vector<8x8xbf16>
    %21 = arith.truncf %12 : vector<8x8xf32> to vector<8x8xbf16>
    %22 = arith.truncf %17 : vector<8x8xf32> to vector<8x8xbf16>
    %cst_21 = arith.constant dense<0.000000e+00> : vector<8x8xf32>
    %23 = tpu.matmul %20, %21, %cst_21 {dimension_numbers = #tpu.dot_dimension_numbers<[1], [1], [0], [0], [0, 0, 1, 0], [], []>} : vector<8x8xbf16>, vector<8x8xbf16>, vector<8x8xf32> -> vector<8x8xf32>
    %cst_22 = arith.constant dense<0xFF800000> : vector<8xf32>
    %24 = vector.multi_reduction <maximumf>, %23, %cst_22 [1] : vector<8x8xf32> to vector<8xf32>
    %25 = vector.shape_cast %24 : vector<8xf32> to vector<8x1xf32>
    %26 = vector.broadcast %25 : vector<8x1xf32> to vector<8x8xf32>
    %27 = arith.subf %23, %26 : vector<8x8xf32>
    %28 = math.exp %27 : vector<8x8xf32>
    %cst_23 = arith.constant dense<0.000000e+00> : vector<8xf32>
    %29 = vector.multi_reduction <add>, %28, %cst_23 [1] : vector<8x8xf32> to vector<8xf32>
    %30 = vector.shape_cast %29 : vector<8xf32> to vector<8x1xf32>
    %31 = tpu.reciprocal %30 {approx = true} : vector<8x1xf32> -> vector<8x1xf32>
    %32 = vector.broadcast %31 : vector<8x1xf32> to vector<8x8xf32>
    %33 = arith.mulf %28, %32 : vector<8x8xf32>
    %34 = arith.truncf %33 : vector<8x8xf32> to vector<8x8xbf16>
    %c0_24 = arith.constant 0 : index
    %c0_25 = arith.constant 0 : index
    %c0_26 = arith.constant 0 : index
    %c0_27 = arith.constant 0 : index
    %35 = vector.load %arg10[%c0_24, %c0_25, %c0_26, %c0_27] : memref<1x1x8x8xbf16, #tpu.memory_space<vmem>>, vector<1x1x8x8xbf16>
    %36 = vector.shape_cast %35 : vector<1x1x8x8xbf16> to vector<8x8xbf16>
    %37 = vector.shape_cast %34 : vector<8x8xbf16> to vector<1x1x8x8xbf16>
    tpu.vector_store %arg10[%c0_24, %c0_25, %c0_26, %c0_27], %37 {strides = array<i32>} : memref<1x1x8x8xbf16, #tpu.memory_space<vmem>>, vector<1x1x8x8xbf16>,
    %38 = arith.truncf %33 : vector<8x8xf32> to vector<8x8xbf16>
    %cst_28 = arith.constant dense<0.000000e+00> : vector<8x8xf32>
    %39 = tpu.matmul %38, %22, %cst_28 {dimension_numbers = #tpu.dot_dimension_numbers<[1], [0], [0], [1], [0, 0, 1, 1], [], []>} : vector<8x8xbf16>, vector<8x8xbf16>, vector<8x8xf32> -> vector<8x8xf32>
    %c0_29 = arith.constant 0 : index
    %c0_30 = arith.constant 0 : index
    %40 = vector.load %arg11[%c0_29, %c0_30] : memref<8x32xf32, #tpu.memory_space<vmem>>, vector<8x32xf32>
    %41 = arith.truncf %39 : vector<8x8xf32> to vector<8x8xbf16>
    %c0_31 = arith.constant 0 : index
    %c0_32 = arith.constant 0 : index
    %c0_33 = arith.constant 0 : index
    %42 = vector.load %arg8[%c0_31, %c0_32, %c0_33] : memref<1x8x32xbf16, #tpu.memory_space<vmem>>, vector<1x8x32xbf16>
    %43 = vector.shape_cast %42 : vector<1x8x32xbf16> to vector<8x32xbf16>
    %cst_34 = arith.constant dense<0.000000e+00> : vector<8x32xf32>
    %44 = tpu.matmul %41, %43, %cst_34 {dimension_numbers = #tpu.dot_dimension_numbers<[1], [0], [0], [1], [0, 0, 1, 1], [], []>} : vector<8x8xbf16>, vector<8x32xbf16>, vector<8x32xf32> -> vector<8x32xf32>
    %45 = arith.addf %40, %44 : vector<8x32xf32>
    %c0_35 = arith.constant 0 : index
    %c0_36 = arith.constant 0 : index
    %46 = vector.load %arg11[%c0_35, %c0_36] : memref<8x32xf32, #tpu.memory_space<vmem>>, vector<8x32xf32>
    tpu.vector_store %arg11[%c0_35, %c0_36], %45 {strides = array<i32>} : memref<8x32xf32, #tpu.memory_space<vmem>>, vector<8x32xf32>,
    %c3_i32 = arith.constant 3 : i32
    %47 = arith.cmpi eq, %arg1, %c3_i32 : i32
    %48 = arith.extui %47 : i1 to i32
    %c0_i32_37 = arith.constant 0 : i32
    %49 = arith.cmpi ne, %48, %c0_i32_37 : i32
    scf.if %49 {
      %c0_38 = arith.constant 0 : index
      %c0_39 = arith.constant 0 : index
      %50 = vector.load %arg11[%c0_38, %c0_39] : memref<8x32xf32, #tpu.memory_space<vmem>>, vector<8x32xf32>
      %51 = arith.truncf %50 : vector<8x32xf32> to vector<8x32xbf16>
      %c0_40 = arith.constant 0 : index
      %c0_41 = arith.constant 0 : index
      %c0_42 = arith.constant 0 : index
      %52 = vector.load %arg9[%c0_40, %c0_41, %c0_42] : memref<1x8x32xbf16, #tpu.memory_space<vmem>>, vector<1x8x32xbf16>
      %53 = vector.shape_cast %52 : vector<1x8x32xbf16> to vector<8x32xbf16>
      %54 = vector.shape_cast %51 : vector<8x32xbf16> to vector<1x8x32xbf16>
      tpu.vector_store %arg9[%c0_40, %c0_41, %c0_42], %54 {strides = array<i32>} : memref<1x8x32xbf16, #tpu.memory_space<vmem>>, vector<1x8x32xbf16>,
    } else {
    }
    return
  }
  func.func @transform_0(%arg0: i32, %arg1: i32) -> (i32, i32, i32) {
    %c0_i32 = arith.constant 0 : i32
    %c0_i32_0 = arith.constant 0 : i32
    %c0_i32_1 = arith.constant 0 : i32
    return %arg0, %c0_i32, %c0_i32_0 : i32, i32, i32
  }
  func.func @transform_1(%arg0: i32, %arg1: i32) -> (i32, i32, i32) {
    %c0_i32 = arith.constant 0 : i32
    %c0_i32_0 = arith.constant 0 : i32
    %c0_i32_1 = arith.constant 0 : i32
    return %arg0, %c0_i32, %c0_i32_0 : i32, i32, i32
  }
  func.func @transform_2(%arg0: i32, %arg1: i32) -> (i32, i32, i32) {
    %c0_i32 = arith.constant 0 : i32
    %c0_i32_0 = arith.constant 0 : i32
    %c0_i32_1 = arith.constant 0 : i32
    return %arg0, %c0_i32, %c0_i32_0 : i32, i32, i32
  }
  func.func @transform_3(%arg0: i32, %arg1: i32) -> (i32, i32, i32) {
    %c0_i32 = arith.constant 0 : i32
    %c0_i32_0 = arith.constant 0 : i32
    %c0_i32_1 = arith.constant 0 : i32
    return %arg1, %c0_i32, %c0_i32_0 : i32, i32, i32
  }
  func.func @transform_4(%arg0: i32, %arg1: i32) -> (i32, i32, i32) {
    %c0_i32 = arith.constant 0 : i32
    %c0_i32_0 = arith.constant 0 : i32
    %c0_i32_1 = arith.constant 0 : i32
    return %arg1, %c0_i32, %c0_i32_0 : i32, i32, i32
  }
  func.func @transform_5(%arg0: i32, %arg1: i32) -> (i32, i32, i32) {
    %c0_i32 = arith.constant 0 : i32
    %c0_i32_0 = arith.constant 0 : i32
    %c0_i32_1 = arith.constant 0 : i32
    return %arg1, %c0_i32, %c0_i32_0 : i32, i32, i32
  }
  func.func @transform_6(%arg0: i32, %arg1: i32) -> (i32, i32, i32) {
    %c0_i32 = arith.constant 0 : i32
    %c0_i32_0 = arith.constant 0 : i32
    %c0_i32_1 = arith.constant 0 : i32
    return %arg1, %c0_i32, %c0_i32_0 : i32, i32, i32
  }
  func.func @transform_7(%arg0: i32, %arg1: i32) -> (i32, i32, i32) {
    %c0_i32 = arith.constant 0 : i32
    %c0_i32_0 = arith.constant 0 : i32
    %c0_i32_1 = arith.constant 0 : i32
    return %arg0, %c0_i32, %c0_i32_0 : i32, i32, i32
  }
  func.func @transform_8(%arg0: i32, %arg1: i32) -> (i32, i32, i32, i32) {
    %c0_i32 = arith.constant 0 : i32
    %c0_i32_0 = arith.constant 0 : i32
    %c0_i32_1 = arith.constant 0 : i32
    return %arg0, %arg1, %c0_i32, %c0_i32_0 : i32, i32, i32, i32
  }
}

</mosaic_0001>

<llo_original>
// kernel: tpu_custom_call.1
$region0: #{tpu_custom_call.1}
  #allocation0 [shape = 'u32[]', space=smem, size = 0x4, offset = 0x4, fixed_abs, tag = 'smem constant byte address 0x4 - core index']
  #allocation1 [shape = 'u32[144,128]{1,0:T(1,128)}', space=vmem, size = 0x12000, scoped, tag = 'internal scratch']
  #allocation2 [shape = 'f32[8,32]{1,0:T(8,128)}', space=vmem, size = 0x1000, scoped, tag = 'scratch operand']
  %s0 = inlined_call_operand.vmem [shape: bf16[2,8,32], index: 0, kind: input, shape index: {}]
  %s1 = inlined_call_operand.vmem [shape: bf16[2,8,32], index: 1, kind: input, shape index: {}]
  %s2 = inlined_call_operand.vmem [shape: bf16[2,8,32], index: 2, kind: input, shape index: {}]
  %s3 = inlined_call_operand.vmem [shape: bf16[4,32,8], index: 3, kind: input, shape index: {}]
  %s4 = inlined_call_operand.vmem [shape: bf16[4,32,8], index: 4, kind: input, shape index: {}]
  %s5 = inlined_call_operand.vmem [shape: bf16[4,32,8], index: 5, kind: input, shape index: {}]
  %s6 = inlined_call_operand.vmem [shape: bf16[4,8,32], index: 6, kind: input, shape index: {}]
  %s7 = inlined_call_operand.hbm [shape: bf16[2,8,32], index: 7, kind: output, shape index: {0}]
  %s8 = inlined_call_operand.hbm [shape: bf16[2,4,8,8], index: 8, kind: output, shape index: {1}]
  %9 = xla_tuple %s7, %s8
  %s10 = sld [smem:[#allocation0]]
  $region77: #{tpu_custom_call.1} parent=0
    _
  %s12 = ssub.s32 1, %s10
  %s13 = scalar_select 0, %s12, %s10
  $region1: #{tpu_custom_call.1} parent=0
    #allocation3 [shape = 'u8[4096]{0}', space=vmem, size = 0x1000, scoped, tag = 'output window, operand 0']
    #allocation4 [shape = 's32[2]{0}', space=sflag, size = 0x8, scoped, tag = 'scoped memory for tpu_custom_call.1']
    #allocation5 [shape = 'u8[4096]{0}', space=vmem, size = 0x1000, scoped, tag = 'output window, operand 1']
    #allocation6 [shape = 's32[2]{0}', space=sflag, size = 0x8, scoped, tag = 'scoped memory for tpu_custom_call.1']
    %14 = vsyncpa [#allocation4], 0
    %s15 = scalar_lea.sflag [#allocation4], 1
    %16 = vsyncpa %s15, 0
    %17 = vsyncpa [#allocation6], 0
    %s18 = scalar_lea.sflag [#allocation6], 1
    %19 = vsyncpa %s18, 0
    loop: start=0, step=1, limit=10
    $region2: #{tpu_custom_call.1} parent=1 // loop_pre_header
      _
    $region3: #{tpu_custom_call.1} parent=1 // loop_header
      %s21 = sphi 0, %s25
      %p22 = scmp.ge.s32.totalorder %s21, 10
      %s28 = sphi 0, %s40
      %s29 = sphi 0, %s36
      %s30 = sphi 0, %s28
      %s31 = sphi 0, %s29
      %s32 = sphi 0, %s30
      %s33 = sphi 0, %s31
      %s43 = sphi 0, %s45
      %s46 = sphi 0, %s43
      %s47 = sphi 0, %s46
      %s63 = sphi 0, %s47
      %s69 = sphi 0, %s71
      %s72 = sphi 0, %s69
      %s73 = sphi 0, %s72
      %s89 = sphi 0, %s73
      %s95 = sphi 0, %s97
      %s98 = sphi 0, %s95
      %s99 = sphi 0, %s98
      %s115 = sphi 0, %s99
      %s121 = sphi 0, %s123
      %s124 = sphi 0, %s121
      %s125 = sphi 0, %s124
      %s141 = sphi 0, %s125
      %s147 = sphi 0, %s149
      %s150 = sphi 0, %s147
      %s151 = sphi 0, %s150
      %s167 = sphi 0, %s151
      %s173 = sphi 0, %s175
      %s176 = sphi 0, %s173
      %s177 = sphi 0, %s176
      %s193 = sphi 0, %s177
      %s199 = sphi 0, %s201
      %s202 = sphi 0, %s199
      %s203 = sphi 0, %s202
      %s219 = sphi 0, %s203
      %s225 = sphi 0, %s227
      %s228 = sphi 0, %s225
      %s229 = sphi 0, %s228
      %s245 = sphi 0, %s229
      %s253 = sphi 0, %s255
      %s256 = sphi 0, %s253
      %s257 = sphi 0, %s256
      %s273 = sphi 0, %s257
    $region4: #{tpu_custom_call.1} parent=1 // loop_header_branch
      %24 = sbr.rel (%p22) target = $region8
    $region5: #{tpu_custom_call.1} parent=1 // loop_body
      %s26 = ssub.s32 %s21, 1
      %s27 = ssub.s32 %s21, 2
      %s34 = sadd.s32 1, %s29
      %p35 = scmp.ge.s32.totalorder %s34, 4
      %s36 = scalar_select %p35, 0, %s34
      %s37 = sadd.s32 1, %s28
      %s38 = scalar_select %p35, %s37, %s28
      %p39 = scmp.ge.s32.totalorder %s38, 2
      %s40 = scalar_select %p39, 0, %s38
      %s41 = ssub.s32 %s28, %s40
      %p42 = scmp.eq.s32.totalorder %s41, 0
      %s44 = sadd.s32 %s43, 1
      %s45 = scalar_select %p42, %s43, %s44
      %p48 = pneg %p42
      %p49 = scmp.eq.s32.totalorder %s21, 7
      %p50 = por %p48, %p49
      %p51 = scmp.ne.s32.totalorder %s43, %s46
      %p52 = scmp.eq.s32.totalorder %s21, 0
      %p53 = por %p51, %p52
      %p54 = scmp.ne.s32.totalorder %s43, %s46
      %p55 = scmp.eq.s32.totalorder %s26, 7
      %p56 = por %p54, %p55
      %p57 = scmp.ne.s32.totalorder %s46, %s47
      %p58 = scmp.eq.s32.totalorder %s26, 0
      %p59 = por %p57, %p58
      %p60 = scmp.ne.s32.totalorder %s46, %s47
      %p61 = scmp.eq.s32.totalorder %s27, 7
      %p62 = por %p60, %p61
      %p64 = scmp.ne.s32.totalorder %s47, %s63
      %p65 = scmp.eq.s32.totalorder %s27, 0
      %p66 = por %p64, %p65
      %s67 = ssub.s32 %s28, %s40
      %p68 = scmp.eq.s32.totalorder %s67, 0
      %s70 = sadd.s32 %s69, 1
      %s71 = scalar_select %p68, %s69, %s70
      %p74 = pneg %p68
      %p75 = scmp.eq.s32.totalorder %s21, 7
      %p76 = por %p74, %p75
      %p77 = scmp.ne.s32.totalorder %s69, %s72
      %p78 = scmp.eq.s32.totalorder %s21, 0
      %p79 = por %p77, %p78
      %p80 = scmp.ne.s32.totalorder %s69, %s72
      %p81 = scmp.eq.s32.totalorder %s26, 7
      %p82 = por %p80, %p81
      %p83 = scmp.ne.s32.totalorder %s72, %s73
      %p84 = scmp.eq.s32.totalorder %s26, 0
      %p85 = por %p83, %p84
      %p86 = scmp.ne.s32.totalorder %s72, %s73
      %p87 = scmp.eq.s32.totalorder %s27, 7
      %p88 = por %p86, %p87
      %p90 = scmp.ne.s32.totalorder %s73, %s89
      %p91 = scmp.eq.s32.totalorder %s27, 0
      %p92 = por %p90, %p91
      %s93 = ssub.s32 %s28, %s40
      %p94 = scmp.eq.s32.totalorder %s93, 0
      %s96 = sadd.s32 %s95, 1
      %s97 = scalar_select %p94, %s95, %s96
      %p100 = pneg %p94
      %p101 = scmp.eq.s32.totalorder %s21, 7
      %p102 = por %p100, %p101
      %p103 = scmp.ne.s32.totalorder %s95, %s98
      %p104 = scmp.eq.s32.totalorder %s21, 0
      %p105 = por %p103, %p104
      %p106 = scmp.ne.s32.totalorder %s95, %s98
      %p107 = scmp.eq.s32.totalorder %s26, 7
      %p108 = por %p106, %p107
      %p109 = scmp.ne.s32.totalorder %s98, %s99
      %p110 = scmp.eq.s32.totalorder %s26, 0
      %p111 = por %p109, %p110
      %p112 = scmp.ne.s32.totalorder %s98, %s99
      %p113 = scmp.eq.s32.totalorder %s27, 7
      %p114 = por %p112, %p113
      %p116 = scmp.ne.s32.totalorder %s99, %s115
      %p117 = scmp.eq.s32.totalorder %s27, 0
      %p118 = por %p116, %p117
      %s119 = ssub.s32 %s29, %s36
      %p120 = scmp.eq.s32.totalorder %s119, 0
      %s122 = sadd.s32 %s121, 1
      %s123 = scalar_select %p120, %s121, %s122
      %p126 = pneg %p120
      %p127 = scmp.eq.s32.totalorder %s21, 7
      %p128 = por %p126, %p127
      %p129 = scmp.ne.s32.totalorder %s121, %s124
      %p130 = scmp.eq.s32.totalorder %s21, 0
      %p131 = por %p129, %p130
      %p132 = scmp.ne.s32.totalorder %s121, %s124
      %p133 = scmp.eq.s32.totalorder %s26, 7
      %p134 = por %p132, %p133
      %p135 = scmp.ne.s32.totalorder %s124, %s125
      %p136 = scmp.eq.s32.totalorder %s26, 0
      %p137 = por %p135, %p136
      %p138 = scmp.ne.s32.totalorder %s124, %s125
      %p139 = scmp.eq.s32.totalorder %s27, 7
      %p140 = por %p138, %p139
      %p142 = scmp.ne.s32.totalorder %s125, %s141
      %p143 = scmp.eq.s32.totalorder %s27, 0
      %p144 = por %p142, %p143
      %s145 = ssub.s32 %s29, %s36
      %p146 = scmp.eq.s32.totalorder %s145, 0
      %s148 = sadd.s32 %s147, 1
      %s149 = scalar_select %p146, %s147, %s148
      %p152 = pneg %p146
      %p153 = scmp.eq.s32.totalorder %s21, 7
      %p154 = por %p152, %p153
      %p155 = scmp.ne.s32.totalorder %s147, %s150
      %p156 = scmp.eq.s32.totalorder %s21, 0
      %p157 = por %p155, %p156
      %p158 = scmp.ne.s32.totalorder %s147, %s150
      %p159 = scmp.eq.s32.totalorder %s26, 7
      %p160 = por %p158, %p159
      %p161 = scmp.ne.s32.totalorder %s150, %s151
      %p162 = scmp.eq.s32.totalorder %s26, 0
      %p163 = por %p161, %p162
      %p164 = scmp.ne.s32.totalorder %s150, %s151
      %p165 = scmp.eq.s32.totalorder %s27, 7
      %p166 = por %p164, %p165
      %p168 = scmp.ne.s32.totalorder %s151, %s167
      %p169 = scmp.eq.s32.totalorder %s27, 0
      %p170 = por %p168, %p169
      %s171 = ssub.s32 %s29, %s36
      %p172 = scmp.eq.s32.totalorder %s171, 0
      %s174 = sadd.s32 %s173, 1
      %s175 = scalar_select %p172, %s173, %s174
      %p178 = pneg %p172
      %p179 = scmp.eq.s32.totalorder %s21, 7
      %p180 = por %p178, %p179
      %p181 = scmp.ne.s32.totalorder %s173, %s176
      %p182 = scmp.eq.s32.totalorder %s21, 0
      %p183 = por %p181, %p182
      %p184 = scmp.ne.s32.totalorder %s173, %s176
      %p185 = scmp.eq.s32.totalorder %s26, 7
      %p186 = por %p184, %p185
      %p187 = scmp.ne.s32.totalorder %s176, %s177
      %p188 = scmp.eq.s32.totalorder %s26, 0
      %p189 = por %p187, %p188
      %p190 = scmp.ne.s32.totalorder %s176, %s177
      %p191 = scmp.eq.s32.totalorder %s27, 7
      %p192 = por %p190, %p191
      %p194 = scmp.ne.s32.totalorder %s177, %s193
      %p195 = scmp.eq.s32.totalorder %s27, 0
      %p196 = por %p194, %p195
      %s197 = ssub.s32 %s29, %s36
      %p198 = scmp.eq.s32.totalorder %s197, 0
      %s200 = sadd.s32 %s199, 1
      %s201 = scalar_select %p198, %s199, %s200
      %p204 = pneg %p198
      %p205 = scmp.eq.s32.totalorder %s21, 7
      %p206 = por %p204, %p205
      %p207 = scmp.ne.s32.totalorder %s199, %s202
      %p208 = scmp.eq.s32.totalorder %s21, 0
      %p209 = por %p207, %p208
      %p210 = scmp.ne.s32.totalorder %s199, %s202
      %p211 = scmp.eq.s32.totalorder %s26, 7
      %p212 = por %p210, %p211
      %p213 = scmp.ne.s32.totalorder %s202, %s203
      %p214 = scmp.eq.s32.totalorder %s26, 0
      %p215 = por %p213, %p214
      %p216 = scmp.ne.s32.totalorder %s202, %s203
      %p217 = scmp.eq.s32.totalorder %s27, 7
      %p218 = por %p216, %p217
      %p220 = scmp.ne.s32.totalorder %s203, %s219
      %p221 = scmp.eq.s32.totalorder %s27, 0
      %p222 = por %p220, %p221
      %s223 = ssub.s32 %s28, %s40
      %p224 = scmp.eq.s32.totalorder %s223, 0
      %s226 = sadd.s32 %s225, 1
      %s227 = scalar_select %p224, %s225, %s226
      %p230 = pneg %p224
      %p231 = scmp.eq.s32.totalorder %s21, 7
      %p232 = por %p230, %p231
      %p233 = scmp.ne.s32.totalorder %s225, %s228
      %p234 = scmp.eq.s32.totalorder %s21, 0
      %p235 = por %p233, %p234
      %p236 = scmp.ne.s32.totalorder %s225, %s228
      %p237 = scmp.eq.s32.totalorder %s26, 7
      %p238 = por %p236, %p237
      %p239 = scmp.ne.s32.totalorder %s228, %s229
      %p240 = scmp.eq.s32.totalorder %s26, 0
      %p241 = por %p239, %p240
      %p242 = scmp.ne.s32.totalorder %s228, %s229
      %p243 = scmp.eq.s32.totalorder %s27, 7
      %p244 = por %p242, %p243
      %p246 = scmp.ne.s32.totalorder %s229, %s245
      %p247 = scmp.eq.s32.totalorder %s27, 0
      %p248 = por %p246, %p247
      %s249 = ssub.s32 %s28, %s40
      %s250 = ssub.s32 %s29, %s36
      %s251 = sor.u32 %s249, %s250
      %p252 = scmp.eq.s32.totalorder %s251, 0
      %s254 = sadd.s32 %s253, 1
      %s255 = scalar_select %p252, %s253, %s254
      %p258 = pneg %p252
      %p259 = scmp.eq.s32.totalorder %s21, 7
      %p260 = por %p258, %p259
      %p261 = scmp.ne.s32.totalorder %s253, %s256
      %p262 = scmp.eq.s32.totalorder %s21, 0
      %p263 = por %p261, %p262
      %p264 = scmp.ne.s32.totalorder %s253, %s256
      %p265 = scmp.eq.s32.totalorder %s26, 7
      %p266 = por %p264, %p265
      %p267 = scmp.ne.s32.totalorder %s256, %s257
      %p268 = scmp.eq.s32.totalorder %s26, 0
      %p269 = por %p267, %p268
      %p270 = scmp.ne.s32.totalorder %s256, %s257
      %p271 = scmp.eq.s32.totalorder %s27, 7
      %p272 = por %p270, %p271
      %p274 = scmp.ne.s32.totalorder %s257, %s273
      %p275 = scmp.eq.s32.totalorder %s27, 0
      %p276 = por %p274, %p275
      %p277 = scmp.le.s32.totalorder 1, %s21
      %p278 = scmp.lt.s32.totalorder %s21, 9
      %p279 = pnand %p277, %p278
      %p280 = pneg %p279
      // Predicated region
      $region9: #{tpu_custom_call.1} parent=5 // pred_check
        _
      $region10: #{tpu_custom_call.1} parent=5 // pred_check_branch
        %282 = sbr.rel (%p279) target = $region12
      $region11: #{tpu_custom_call.1} parent=5 // pred_region
        %s283 = ssub.s32 %s21, 1
      $region12: #{tpu_custom_call.1} parent=5 // pred_fallthru
        _
      %p284 = scmp.lt.s32.totalorder %s21, 8
      // Predicated region
      $region13: #{tpu_custom_call.1} parent=5 // pred_check
        %p285 = pneg %p284
      $region14: #{tpu_custom_call.1} parent=5 // pred_check_branch
        %287 = sbr.rel (%p285) target = $region16
      $region15: #{tpu_custom_call.1} parent=5 // pred_region
        // Predicated region
        $region17: #{tpu_custom_call.1} parent=15 // pred_check
          %p288 = pneg %p53
        $region18: #{tpu_custom_call.1} parent=15 // pred_check_branch
          %290 = sbr.rel (%p288) target = $region20
        $region19: #{tpu_custom_call.1} parent=15 // pred_region
          %p291 = scmp.lt.s32.totalorder %s28, 1
          %s292 = scalar_select %p291, %s28, 1
          %s293 = smul.addr %s292, 4
          %s294 = scalar_lea.vmem %s0, %s293
        $region20: #{tpu_custom_call.1} parent=15 // pred_fallthru
          _
        // Predicated region
        $region21: #{tpu_custom_call.1} parent=15 // pred_check
          %p295 = pneg %p79
        $region22: #{tpu_custom_call.1} parent=15 // pred_check_branch
          %297 = sbr.rel (%p295) target = $region24
        $region23: #{tpu_custom_call.1} parent=15 // pred_region
          %p298 = scmp.lt.s32.totalorder %s28, 1
          %s299 = scalar_select %p298, %s28, 1
          %s300 = smul.addr %s299, 4
          %s301 = scalar_lea.vmem %s1, %s300
        $region24: #{tpu_custom_call.1} parent=15 // pred_fallthru
          _
        // Predicated region
        $region25: #{tpu_custom_call.1} parent=15 // pred_check
          %p302 = pneg %p105
        $region26: #{tpu_custom_call.1} parent=15 // pred_check_branch
          %304 = sbr.rel (%p302) target = $region28
        $region27: #{tpu_custom_call.1} parent=15 // pred_region
          %p305 = scmp.lt.s32.totalorder %s28, 1
          %s306 = scalar_select %p305, %s28, 1
          %s307 = smul.addr %s306, 4
          %s308 = scalar_lea.vmem %s2, %s307
        $region28: #{tpu_custom_call.1} parent=15 // pred_fallthru
          _
        // Predicated region
        $region29: #{tpu_custom_call.1} parent=15 // pred_check
          %p309 = pneg %p131
        $region30: #{tpu_custom_call.1} parent=15 // pred_check_branch
          %311 = sbr.rel (%p309) target = $region32
        $region31: #{tpu_custom_call.1} parent=15 // pred_region
          %p312 = scmp.lt.s32.totalorder %s29, 3
          %s313 = scalar_select %p312, %s29, 3
          %s314 = smul.addr %s313, 4
          %s315 = smul.addr %s314, 4
          %s316 = scalar_lea.vmem %s3, %s315
        $region32: #{tpu_custom_call.1} parent=15 // pred_fallthru
          _
        // Predicated region
        $region33: #{tpu_custom_call.1} parent=15 // pred_check
          %p317 = pneg %p157
        $region34: #{tpu_custom_call.1} parent=15 // pred_check_branch
          %319 = sbr.rel (%p317) target = $region36
        $region35: #{tpu_custom_call.1} parent=15 // pred_region
          %p320 = scmp.lt.s32.totalorder %s29, 3
          %s321 = scalar_select %p320, %s29, 3
          %s322 = smul.addr %s321, 4
          %s323 = smul.addr %s322, 4
          %s324 = scalar_lea.vmem %s4, %s323
        $region36: #{tpu_custom_call.1} parent=15 // pred_fallthru
          _
        // Predicated region
        $region37: #{tpu_custom_call.1} parent=15 // pred_check
          %p325 = pneg %p183
        $region38: #{tpu_custom_call.1} parent=15 // pred_check_branch
          %327 = sbr.rel (%p325) target = $region40
        $region39: #{tpu_custom_call.1} parent=15 // pred_region
          %p328 = scmp.lt.s32.totalorder %s29, 3
          %s329 = scalar_select %p328, %s29, 3
          %s330 = smul.addr %s329, 4
          %s331 = smul.addr %s330, 4
          %s332 = scalar_lea.vmem %s5, %s331
        $region40: #{tpu_custom_call.1} parent=15 // pred_fallthru
          _
        // Predicated region
        $region41: #{tpu_custom_call.1} parent=15 // pred_check
          %p333 = pneg %p209
        $region42: #{tpu_custom_call.1} parent=15 // pred_check_branch
          %335 = sbr.rel (%p333) target = $region44
        $region43: #{tpu_custom_call.1} parent=15 // pred_region
          %p336 = scmp.lt.s32.totalorder %s29, 3
          %s337 = scalar_select %p336, %s29, 3
          %s338 = smul.addr %s337, 4
          %s339 = scalar_lea.vmem %s6, %s338
        $region44: #{tpu_custom_call.1} parent=15 // pred_fallthru
          _
      $region16: #{tpu_custom_call.1} parent=5 // pred_fallthru
        _
      %p340 = scmp.le.s32.totalorder 1, %s21
      %p341 = scmp.lt.s32.totalorder %s21, 9
      %p342 = pnand %p340, %p341
      %p343 = pneg %p342
      // Predicated region
      $region45: #{tpu_custom_call.1} parent=5 // pred_check
        _
      $region46: #{tpu_custom_call.1} parent=5 // pred_check_branch
        %345 = sbr.rel (%p342) target = $region48
      $region47: #{tpu_custom_call.1} parent=5 // pred_region
        %s346 = ssub.s32 %s21, 1
        %p347 = scmp.lt.s32.totalorder %s30, 1
        %s348 = scalar_select %p347, %s30, 1
        %s349 = smul.addr %s348, 4
        %s350 = scalar_lea.vmem %s0, %s349
        %p351 = pneg %p59
        %p352 = pneg %p56
        %p353 = scmp.lt.s32.totalorder %s30, 1
        %s354 = scalar_select %p353, %s30, 1
        %s355 = smul.addr %s354, 4
        %s356 = scalar_lea.vmem %s1, %s355
        %p357 = pneg %p85
        %p358 = pneg %p82
        %p359 = scmp.lt.s32.totalorder %s30, 1
        %s360 = scalar_select %p359, %s30, 1
        %s361 = smul.addr %s360, 4
        %s362 = scalar_lea.vmem %s2, %s361
        %p363 = pneg %p111
        %p364 = pneg %p108
        %p365 = scmp.lt.s32.totalorder %s31, 3
        %s366 = scalar_select %p365, %s31, 3
        %s367 = smul.addr %s366, 4
        %s368 = smul.addr %s367, 4
        %s369 = scalar_lea.vmem %s3, %s368
        %p370 = pneg %p137
        %p371 = pneg %p134
        %p372 = scmp.lt.s32.totalorder %s31, 3
        %s373 = scalar_select %p372, %s31, 3
        %s374 = smul.addr %s373, 4
        %s375 = smul.addr %s374, 4
        %s376 = scalar_lea.vmem %s4, %s375
        %p377 = pneg %p163
        %p378 = pneg %p160
        %p379 = scmp.lt.s32.totalorder %s31, 3
        %s380 = scalar_select %p379, %s31, 3
        %s381 = smul.addr %s380, 4
        %s382 = smul.addr %s381, 4
        %s383 = scalar_lea.vmem %s5, %s382
        %p384 = pneg %p189
        %p385 = pneg %p186
        %p386 = scmp.lt.s32.totalorder %s31, 3
        %s387 = scalar_select %p386, %s31, 3
        %s388 = smul.addr %s387, 4
        %s389 = scalar_lea.vmem %s6, %s388
        %p390 = pneg %p215
        %p391 = pneg %p212
        %p392 = pneg %p241
        %p393 = pneg %p238
        %s394 = sand.u32 %s228, 1
        %s395 = scalar_lea.sflag [#allocation4], %s394
        %s396 = sand.u32 %s228, 1
        %s397 = smul.addr %s396, 4
        %s398 = scalar_lea.vmem [#allocation3], %s397
        %p399 = pneg %p269
        %p400 = pneg %p266
        %s401 = sand.u32 %s256, 1
        %s402 = scalar_lea.sflag [#allocation6], %s401
        %s403 = sand.u32 %s256, 1
        %s404 = smul.addr %s403, 4
        %s405 = scalar_lea.vmem [#allocation5], %s404
        %p406 = scmp.lt.s32.totalorder %s30, 1
        %s407 = scalar_select %p406, %s30, 1
        %s408 = smul.addr %s407, 4
        %s409 = scalar_lea.vmem %s0, %s408
        %p410 = scmp.lt.s32.totalorder %s30, 1
        %s411 = scalar_select %p410, %s30, 1
        %s412 = smul.addr %s411, 4
        %s413 = scalar_lea.vmem %s1, %s412
        %p414 = scmp.lt.s32.totalorder %s30, 1
        %s415 = scalar_select %p414, %s30, 1
        %s416 = smul.addr %s415, 4
        %s417 = scalar_lea.vmem %s2, %s416
        %p418 = scmp.lt.s32.totalorder %s31, 3
        %s419 = scalar_select %p418, %s31, 3
        %s420 = smul.addr %s419, 4
        %s421 = smul.addr %s420, 4
        %s422 = scalar_lea.vmem %s3, %s421
        %p423 = scmp.lt.s32.totalorder %s31, 3
        %s424 = scalar_select %p423, %s31, 3
        %s425 = smul.addr %s424, 4
        %s426 = smul.addr %s425, 4
        %s427 = scalar_lea.vmem %s4, %s426
        %p428 = scmp.lt.s32.totalorder %s31, 3
        %s429 = scalar_select %p428, %s31, 3
        %s430 = smul.addr %s429, 4
        %s431 = smul.addr %s430, 4
        %s432 = scalar_lea.vmem %s5, %s431
        %p433 = scmp.lt.s32.totalorder %s31, 3
        %s434 = scalar_select %p433, %s31, 3
        %s435 = smul.addr %s434, 4
        %s436 = scalar_lea.vmem %s6, %s435
        %p438 = scmp.eq.s32.totalorder %s31, 0
        // Predicated region
        $region49: #{tpu_custom_call.1} parent=47 // pred_check
          %p439 = pneg %p438
        $region50: #{tpu_custom_call.1} parent=47 // pred_check_branch
          %441 = sbr.rel (%p439) target = $region52
        $region51: #{tpu_custom_call.1} parent=47 // pred_region
          %vm442 = vcmask 261120
          %443 = vst.msk [vmem:[#allocation2] sm:$0xff] %vm442, 0.0
        $region52: #{tpu_custom_call.1} parent=47 // pred_fallthru
          _
        %v444 = vld [vmem:[%s409] sm:$0xf]
        %v445 = vld [vmem:[%s422] sm:$0xf]
        %v446 = vld [vmem:[%s422 + $0x4] sm:$0xf]
        %v447 = vld [vmem:[%s422 + $0x8] sm:$0xf]
        %v448 = vld [vmem:[%s422 + $0xc] sm:$0xf]
        %v453 = vunpack.c.l.b16 %v445
        %v454 = vunpack.c.l.b16 %v446
        %v455 = vunpack.c.l.b16 %v447
        %v456 = vunpack.c.l.b16 %v448
        %v457 = vpack.c.b16 %v454, %v453
        %v458 = vpack.c.b16 %v456, %v455
        %vm461 = vcmask 261120
        %v463 = vsel %vm461, %v444, 0
        %465 = vmatprep.subr.bf16.mxu0 0
        %466 = vmatpush1.bf16.msra.mxu0 0
        %467 = vmatprep.subr.bf16.mxu0 0
        %468 = vmatpush1.bf16.msra.mxu0 0
        %469 = vmatprep.subr.bf16.mxu0 0
        %470 = vmatpush1.bf16.msra.mxu0 0
        %471 = vmatprep.subr.bf16.mxu0 0
        %472 = vmatpush1.bf16.msra.mxu0 0
        %473 = vmatprep.subr.bf16.mxu0 0
        %474 = vmatpush1.bf16.msra.mxu0 0
        %475 = vmatprep.subr.bf16.mxu0 0
        %476 = vmatpush1.bf16.msra.mxu0 0
        %477 = vmatprep.subr.bf16.mxu0 0
        %478 = vmatpush1.bf16.msra.mxu0 %v458
        %479 = vmatprep.subr.bf16.mxu0 0
        %480 = vmatpush1.bf16.msra.mxu0 %v457
        %481 = vmatprep.subr.bf16.mxu0 0
        %482 = vmatpush2.bf16.msra.mxu0 0
        %483 = vmatprep.subr.bf16.mxu0 0
        %484 = vmatpush2.bf16.msra.mxu0 0
        %485 = vmatprep.subr.bf16.mxu0 0
        %486 = vmatpush2.bf16.msra.mxu0 0
        %487 = vmatprep.subr.bf16.mxu0 0
        %488 = vmatpush2.bf16.msra.mxu0 0
        %489 = vmatprep.subr.bf16.mxu0 0
        %490 = vmatpush2.bf16.msra.mxu0 0
        %491 = vmatprep.subr.bf16.mxu0 0
        %492 = vmatpush2.bf16.msra.mxu0 0
        %493 = vmatprep.subr.bf16.mxu0 0
        %494 = vmatpush2.bf16.msra.mxu0 0
        %495 = vmatprep.subr.bf16.mxu0 0
        %496 = vmatpush2.bf16.msra.mxu0 0
        %497 = vmatprep.mubr.bf16.mxu0 0
        %498 = vmatmul.mubr.bf16.gmra.mxu0 %v463
        %v499 = vpop.f32.mrf.mxu0
        %v500 = vadd.f32 0.0, %v499
        %v501 = vpop.f32.mrf.mxu0
        %v502 = vpop.f32.mrf.mxu0
        %v503 = vpop.f32.mrf.mxu0
        %504 = vdwg.mxu0
        %v505 = vld [vmem:[%s413] sm:$0xf]
        %v506 = vld [vmem:[%s427] sm:$0xf]
        %v507 = vld [vmem:[%s427 + $0x4] sm:$0xf]
        %v508 = vld [vmem:[%s427 + $0x8] sm:$0xf]
        %v509 = vld [vmem:[%s427 + $0xc] sm:$0xf]
        %v514 = vunpack.c.l.b16 %v506
        %v515 = vunpack.c.l.b16 %v507
        %v516 = vunpack.c.l.b16 %v508
        %v517 = vunpack.c.l.b16 %v509
        %v518 = vpack.c.b16 %v515, %v514
        %v519 = vpack.c.b16 %v517, %v516
        %v523 = vsel %vm461, %v505, 0
        %525 = vmatprep.subr.bf16.mxu0 0
        %526 = vmatpush1.bf16.msra.mxu0 0
        %527 = vmatprep.subr.bf16.mxu0 0
        %528 = vmatpush1.bf16.msra.mxu0 0
        %529 = vmatprep.subr.bf16.mxu0 0
        %530 = vmatpush1.bf16.msra.mxu0 0
        %531 = vmatprep.subr.bf16.mxu0 0
        %532 = vmatpush1.bf16.msra.mxu0 0
        %533 = vmatprep.subr.bf16.mxu0 0
        %534 = vmatpush1.bf16.msra.mxu0 0
        %535 = vmatprep.subr.bf16.mxu0 0
        %536 = vmatpush1.bf16.msra.mxu0 0
        %537 = vmatprep.subr.bf16.mxu0 0
        %538 = vmatpush1.bf16.msra.mxu0 %v519
        %539 = vmatprep.subr.bf16.mxu0 0
        %540 = vmatpush1.bf16.msra.mxu0 %v518
        %541 = vmatprep.subr.bf16.mxu0 0
        %542 = vmatpush2.bf16.msra.mxu0 0
        %543 = vmatprep.subr.bf16.mxu0 0
        %544 = vmatpush2.bf16.msra.mxu0 0
        %545 = vmatprep.subr.bf16.mxu0 0
        %546 = vmatpush2.bf16.msra.mxu0 0
        %547 = vmatprep.subr.bf16.mxu0 0
        %548 = vmatpush2.bf16.msra.mxu0 0
        %549 = vmatprep.subr.bf16.mxu0 0
        %550 = vmatpush2.bf16.msra.mxu0 0
        %551 = vmatprep.subr.bf16.mxu0 0
        %552 = vmatpush2.bf16.msra.mxu0 0
        %553 = vmatprep.subr.bf16.mxu0 0
        %554 = vmatpush2.bf16.msra.mxu0 0
        %555 = vmatprep.subr.bf16.mxu0 0
        %556 = vmatpush2.bf16.msra.mxu0 0
        %557 = vmatprep.mubr.bf16.mxu0 0
        %558 = vmatmul.mubr.bf16.gmra.mxu0 %v523
        %v559 = vpop.f32.mrf.mxu0
        %v560 = vadd.f32 0.0, %v559
        %v561 = vpop.f32.mrf.mxu0
        %v562 = vpop.f32.mrf.mxu0
        %v563 = vpop.f32.mrf.mxu0
        %564 = vdwg.mxu0
        %v565 = vld [vmem:[%s417] sm:$0xf]
        %v566 = vld [vmem:[%s432] sm:$0xf]
        %v567 = vld [vmem:[%s432 + $0x4] sm:$0xf]
        %v568 = vld [vmem:[%s432 + $0x8] sm:$0xf]
        %v569 = vld [vmem:[%s432 + $0xc] sm:$0xf]
        %v574 = vunpack.c.l.b16 %v566
        %v575 = vunpack.c.l.b16 %v567
        %v576 = vunpack.c.l.b16 %v568
        %v577 = vunpack.c.l.b16 %v569
        %v578 = vpack.c.b16 %v575, %v574
        %v579 = vpack.c.b16 %v577, %v576
        %v583 = vsel %vm461, %v565, 0
        %585 = vmatprep.subr.bf16.mxu0 0
        %586 = vmatpush1.bf16.msra.mxu0 0
        %587 = vmatprep.subr.bf16.mxu0 0
        %588 = vmatpush1.bf16.msra.mxu0 0
        %589 = vmatprep.subr.bf16.mxu0 0
        %590 = vmatpush1.bf16.msra.mxu0 0
        %591 = vmatprep.subr.bf16.mxu0 0
        %592 = vmatpush1.bf16.msra.mxu0 0
        %593 = vmatprep.subr.bf16.mxu0 0
        %594 = vmatpush1.bf16.msra.mxu0 0
        %595 = vmatprep.subr.bf16.mxu0 0
        %596 = vmatpush1.bf16.msra.mxu0 0
        %597 = vmatprep.subr.bf16.mxu0 0
        %598 = vmatpush1.bf16.msra.mxu0 %v579
        %599 = vmatprep.subr.bf16.mxu0 0
        %600 = vmatpush1.bf16.msra.mxu0 %v578
        %601 = vmatprep.subr.bf16.mxu0 0
        %602 = vmatpush2.bf16.msra.mxu0 0
        %603 = vmatprep.subr.bf16.mxu0 0
        %604 = vmatpush2.bf16.msra.mxu0 0
        %605 = vmatprep.subr.bf16.mxu0 0
        %606 = vmatpush2.bf16.msra.mxu0 0
        %607 = vmatprep.subr.bf16.mxu0 0
        %608 = vmatpush2.bf16.msra.mxu0 0
        %609 = vmatprep.subr.bf16.mxu0 0
        %610 = vmatpush2.bf16.msra.mxu0 0
        %611 = vmatprep.subr.bf16.mxu0 0
        %612 = vmatpush2.bf16.msra.mxu0 0
        %613 = vmatprep.subr.bf16.mxu0 0
        %614 = vmatpush2.bf16.msra.mxu0 0
        %615 = vmatprep.subr.bf16.mxu0 0
        %616 = vmatpush2.bf16.msra.mxu0 0
        %617 = vmatprep.mubr.bf16.mxu0 0
        %618 = vmatmul.mubr.bf16.gmra.mxu0 %v583
        %v619 = vpop.f32.mrf.mxu0
        %v620 = vadd.f32 0.0, %v619
        %v621 = vpop.f32.mrf.mxu0
        %v622 = vpop.f32.mrf.mxu0
        %v623 = vpop.f32.mrf.mxu0
        %624 = vdwg.mxu0
        %v625 = vmul.f32 %v500, 0.35355338
        %v626 = vpack.c.bf16 %v625, %v625
        %v627 = vpack.c.bf16 %v560, %v560
        %v628 = vpack.c.bf16 %v620, %v620
        %vm629 = vcmask 64512
        %v631 = vsel %vm629, %v626, 0
        %v634 = vsel %vm629, %v627, 0
        %636 = vmatprep.subr.bf16.mxu0 0
        %637 = vmatpush1.bf16.xpose.msra.mxu0 0
        %638 = vmatprep.subr.bf16.mxu0 0
        %639 = vmatpush1.bf16.xpose.msra.mxu0 0
        %640 = vmatprep.subr.bf16.mxu0 0
        %641 = vmatpush1.bf16.xpose.msra.mxu0 0
        %642 = vmatprep.subr.bf16.mxu0 0
        %643 = vmatpush1.bf16.xpose.msra.mxu0 0
        %644 = vmatprep.subr.bf16.mxu0 0
        %645 = vmatpush1.bf16.xpose.msra.mxu0 0
        %646 = vmatprep.subr.bf16.mxu0 0
        %647 = vmatpush1.bf16.xpose.msra.mxu0 0
        %648 = vmatprep.subr.bf16.mxu0 0
        %649 = vmatpush1.bf16.xpose.msra.mxu0 0
        %650 = vmatprep.subr.bf16.mxu0 0
        %651 = vmatpush1.bf16.xpose.msra.mxu0 %v634
        %652 = vmatprep.subr.bf16.mxu0 0
        %653 = vmatpush2.bf16.xpose.msra.mxu0 0
        %654 = vmatprep.subr.bf16.mxu0 0
        %655 = vmatpush2.bf16.xpose.msra.mxu0 0
        %656 = vmatprep.subr.bf16.mxu0 0
        %657 = vmatpush2.bf16.xpose.msra.mxu0 0
        %658 = vmatprep.subr.bf16.mxu0 0
        %659 = vmatpush2.bf16.xpose.msra.mxu0 0
        %660 = vmatprep.subr.bf16.mxu0 0
        %661 = vmatpush2.bf16.xpose.msra.mxu0 0
        %662 = vmatprep.subr.bf16.mxu0 0
        %663 = vmatpush2.bf16.xpose.msra.mxu0 0
        %664 = vmatprep.subr.bf16.mxu0 0
        %665 = vmatpush2.bf16.xpose.msra.mxu0 0
        %666 = vmatprep.subr.bf16.mxu0 0
        %667 = vmatpush2.bf16.xpose.msra.mxu0 0
        %668 = vmatprep.mubr.bf16.mxu0 0
        %669 = vmatmul.mubr.bf16.gmra.mxu0 %v631
        %v670 = vpop.f32.mrf.mxu0
        %v671 = vadd.f32 0.0, %v670
        %v672 = vpop.f32.mrf.mxu0
        %v673 = vpop.f32.mrf.mxu0
        %v674 = vpop.f32.mrf.mxu0
        %675 = vdwg.mxu0
        %v676 = vsel %vm629, %v671, -inf
        %677 = vmax.xlane.f32.xlu0 %v676
        %v678 = vpop.xlane.xlu0 %677
        %v679 = vsub.f32 %v671, %v678
        %v680 = vmul.f32 %v679, 1.442695
        %v681 = vpow.pop %v680
        %v682 = vsel %vm629, %v681, 0.0
        %683 = vadd.xlane.f32.xlu0 %v682
        %v684 = vpop.xlane.xlu0 %683
        %v685 = vrcp.pop %v684
        %v686 = vmul.f32 %v681, %v685
        %v687 = vpack.c.bf16 %v686, %v686
        %vm688 = vcmask 60416
        %689 = vst.msk [vmem:[%s405] sm:$0xf] %vm688, %v687
        %v691 = vsel %vm629, %v687, 0
        %vm693 = vcmask 1043456
        %v695 = vsel %vm693, %v628, 0
        %697 = vmatprep.subr.bf16.mxu0 0
        %698 = vmatpush1.bf16.msra.mxu0 0
        %699 = vmatprep.subr.bf16.mxu0 0
        %700 = vmatpush1.bf16.msra.mxu0 0
        %701 = vmatprep.subr.bf16.mxu0 0
        %702 = vmatpush1.bf16.msra.mxu0 0
        %703 = vmatprep.subr.bf16.mxu0 0
        %704 = vmatpush1.bf16.msra.mxu0 0
        %705 = vmatprep.subr.bf16.mxu0 0
        %706 = vmatpush1.bf16.msra.mxu0 0
        %707 = vmatprep.subr.bf16.mxu0 0
        %708 = vmatpush1.bf16.msra.mxu0 0
        %709 = vmatprep.subr.bf16.mxu0 0
        %710 = vmatpush1.bf16.msra.mxu0 0
        %711 = vmatprep.subr.bf16.mxu0 0
        %712 = vmatpush1.bf16.msra.mxu0 %v695
        %713 = vmatprep.subr.bf16.mxu0 0
        %714 = vmatpush2.bf16.msra.mxu0 0
        %715 = vmatprep.subr.bf16.mxu0 0
        %716 = vmatpush2.bf16.msra.mxu0 0
        %717 = vmatprep.subr.bf16.mxu0 0
        %718 = vmatpush2.bf16.msra.mxu0 0
        %719 = vmatprep.subr.bf16.mxu0 0
        %720 = vmatpush2.bf16.msra.mxu0 0
        %721 = vmatprep.subr.bf16.mxu0 0
        %722 = vmatpush2.bf16.msra.mxu0 0
        %723 = vmatprep.subr.bf16.mxu0 0
        %724 = vmatpush2.bf16.msra.mxu0 0
        %725 = vmatprep.subr.bf16.mxu0 0
        %726 = vmatpush2.bf16.msra.mxu0 0
        %727 = vmatprep.subr.bf16.mxu0 0
        %728 = vmatpush2.bf16.msra.mxu0 0
        %729 = vmatprep.mubr.bf16.mxu0 0
        %730 = vmatmul.mubr.bf16.gmra.mxu0 %v691
        %v731 = vpop.f32.mrf.mxu0
        %v732 = vadd.f32 0.0, %v731
        %v733 = vpop.f32.mrf.mxu0
        %v734 = vpop.f32.mrf.mxu0
        %v735 = vpop.f32.mrf.mxu0
        %736 = vdwg.mxu0
        %v737 = vld [vmem:[#allocation2] sm:$0xff]
        %v738 = vpack.c.bf16 %v732, %v732
        %v739 = vld [vmem:[%s436] sm:$0xf]
        %v741 = vsel %vm629, %v738, 0
        %v744 = vsel %vm693, %v739, 0
        %746 = vmatprep.subr.bf16.mxu0 0
        %747 = vmatpush1.bf16.msra.mxu0 0
        %748 = vmatprep.subr.bf16.mxu0 0
        %749 = vmatpush1.bf16.msra.mxu0 0
        %750 = vmatprep.subr.bf16.mxu0 0
        %751 = vmatpush1.bf16.msra.mxu0 0
        %752 = vmatprep.subr.bf16.mxu0 0
        %753 = vmatpush1.bf16.msra.mxu0 0
        %754 = vmatprep.subr.bf16.mxu0 0
        %755 = vmatpush1.bf16.msra.mxu0 0
        %756 = vmatprep.subr.bf16.mxu0 0
        %757 = vmatpush1.bf16.msra.mxu0 0
        %758 = vmatprep.subr.bf16.mxu0 0
        %759 = vmatpush1.bf16.msra.mxu0 0
        %760 = vmatprep.subr.bf16.mxu0 0
        %761 = vmatpush1.bf16.msra.mxu0 %v744
        %762 = vmatprep.subr.bf16.mxu0 0
        %763 = vmatpush2.bf16.msra.mxu0 0
        %764 = vmatprep.subr.bf16.mxu0 0
        %765 = vmatpush2.bf16.msra.mxu0 0
        %766 = vmatprep.subr.bf16.mxu0 0
        %767 = vmatpush2.bf16.msra.mxu0 0
        %768 = vmatprep.subr.bf16.mxu0 0
        %769 = vmatpush2.bf16.msra.mxu0 0
        %770 = vmatprep.subr.bf16.mxu0 0
        %771 = vmatpush2.bf16.msra.mxu0 0
        %772 = vmatprep.subr.bf16.mxu0 0
        %773 = vmatpush2.bf16.msra.mxu0 0
        %774 = vmatprep.subr.bf16.mxu0 0
        %775 = vmatpush2.bf16.msra.mxu0 0
        %776 = vmatprep.subr.bf16.mxu0 0
        %777 = vmatpush2.bf16.msra.mxu0 0
        %778 = vmatprep.mubr.bf16.mxu0 0
        %779 = vmatmul.mubr.bf16.gmra.mxu0 %v741
        %v780 = vpop.f32.mrf.mxu0
        %v781 = vadd.f32 0.0, %v780
        %v782 = vpop.f32.mrf.mxu0
        %v783 = vpop.f32.mrf.mxu0
        %v784 = vpop.f32.mrf.mxu0
        %785 = vdwg.mxu0
        %v786 = vadd.f32 %v737, %v781
        %787 = vst.msk [vmem:[#allocation2] sm:$0xff] %vm461, %v786
        %p788 = scmp.eq.s32.totalorder %s31, 3
        // Predicated region
        $region53: #{tpu_custom_call.1} parent=47 // pred_check
          %p789 = pneg %p788
        $region54: #{tpu_custom_call.1} parent=47 // pred_check_branch
          %791 = sbr.rel (%p789) target = $region56
        $region55: #{tpu_custom_call.1} parent=47 // pred_region
          %v792 = vld [vmem:[#allocation2] sm:$0xff]
          %v793 = vpack.c.bf16 %v792, %v792
          %vm794 = vcmask 257024
          %795 = vst.msk [vmem:[%s398] sm:$0xf] %vm794, %v793
        $region56: #{tpu_custom_call.1} parent=47 // pred_fallthru
          _
        %s796 = sand.u32 %s228, 1
        %s797 = scalar_lea.sflag [#allocation4], %s796
        %s798 = sand.u32 %s228, 1
        %s799 = smul.addr %s798, 4
        %s800 = scalar_lea.vmem [#allocation3], %s799
        %s801 = sand.u32 %s256, 1
        %s802 = scalar_lea.sflag [#allocation6], %s801
        %s803 = sand.u32 %s256, 1
        %s804 = smul.addr %s803, 4
        %s805 = scalar_lea.vmem [#allocation5], %s804
        // Predicated region
        $region57: #{tpu_custom_call.1} parent=47 // pred_check
          %p806 = pneg %p238
        $region58: #{tpu_custom_call.1} parent=47 // pred_check_branch
          %808 = sbr.rel (%p806) target = $region60
        $region59: #{tpu_custom_call.1} parent=47 // pred_region
          %s810 = ssub.s32 64, 64
          %811 = vsyncadd %s797, %s810
          %s812 = smul.addr %s30, 64
          %s813 = scalar_lea.hbm %s7, %s812
          %s815 = sshll.u32 %s800, 4
          %s816 = int_to_ptr.vmem [resolvable:$true] %s815
          %818 = dma.vmem_to_hbm [thread:$0]  %s816, 64, %s813, %s797
        $region60: #{tpu_custom_call.1} parent=47 // pred_fallthru
          _
        // Predicated region
        $region61: #{tpu_custom_call.1} parent=47 // pred_check
          %p819 = pneg %p266
        $region62: #{tpu_custom_call.1} parent=47 // pred_check_branch
          %821 = sbr.rel (%p819) target = $region64
        $region63: #{tpu_custom_call.1} parent=47 // pred_region
          %s823 = ssub.s32 64, 64
          %824 = vsyncadd %s802, %s823
          %s825 = smul.addr %s30, 4
          %s826 = sadd.s32 %s31, %s825
          %s827 = smul.addr %s826, 64
          %s828 = scalar_lea.hbm %s8, %s827
          %s830 = sshll.u32 %s805, 4
          %s831 = int_to_ptr.vmem [resolvable:$true] %s830
          %833 = dma.vmem_to_hbm [thread:$0]  %s831, 64, %s828, %s802
        $region64: #{tpu_custom_call.1} parent=47 // pred_fallthru
          _
      $region48: #{tpu_custom_call.1} parent=5 // pred_fallthru
        _
      %p834 = scmp.le.s32.totalorder 2, %s21
      // Predicated region
      $region65: #{tpu_custom_call.1} parent=5 // pred_check
        %p835 = pneg %p834
      $region66: #{tpu_custom_call.1} parent=5 // pred_check_branch
        %837 = sbr.rel (%p835) target = $region68
      $region67: #{tpu_custom_call.1} parent=5 // pred_region
        %s838 = ssub.s32 %s21, 2
        // Predicated region
        $region69: #{tpu_custom_call.1} parent=67 // pred_check
          %p839 = pneg %p244
        $region70: #{tpu_custom_call.1} parent=67 // pred_check_branch
          %841 = sbr.rel (%p839) target = $region72
        $region71: #{tpu_custom_call.1} parent=67 // pred_region
          %s842 = sand.u32 %s229, 1
          %s843 = scalar_lea.sflag [#allocation4], %s842
          %s844 = sand.u32 %s229, 1
          %s845 = smul.addr %s844, 4
          %s846 = scalar_lea.vmem [#allocation3], %s845
          %847 = dma.done %s843, 64
        $region72: #{tpu_custom_call.1} parent=67 // pred_fallthru
          _
        // Predicated region
        $region73: #{tpu_custom_call.1} parent=67 // pred_check
          %p848 = pneg %p272
        $region74: #{tpu_custom_call.1} parent=67 // pred_check_branch
          %850 = sbr.rel (%p848) target = $region76
        $region75: #{tpu_custom_call.1} parent=67 // pred_region
          %s851 = sand.u32 %s257, 1
          %s852 = scalar_lea.sflag [#allocation6], %s851
          %s853 = sand.u32 %s257, 1
          %s854 = smul.addr %s853, 4
          %s855 = scalar_lea.vmem [#allocation5], %s854
          %856 = dma.done %s852, 64
        $region76: #{tpu_custom_call.1} parent=67 // pred_fallthru
          _
      $region68: #{tpu_custom_call.1} parent=5 // pred_fallthru
        _
    $region6: #{tpu_custom_call.1} parent=1 // loop_footer
      %s25 = sadd.s32 1, %s21
    $region7: #{tpu_custom_call.1} parent=1 // loop_footer_branch
      %20 = sbr.rel target = $region3
    $region8: #{tpu_custom_call.1} parent=1 // loop_exit
      _
    %857 = vsyncpa [#allocation4], 1
    %s858 = scalar_lea.sflag [#allocation4], 1
    %859 = vsyncpa %s858, 1
    %860 = vsyncpa [#allocation6], 1
    %s861 = scalar_lea.sflag [#allocation6], 1
    %862 = vsyncpa %s861, 1

</llo_original>
